<compile_context>
chip_gen: v7x
topology: tpu7x:2x2x1
jax: 0.10.0
libtpu: 0.0.40
codegen_flags: <defaults>
</compile_context>

<pallas_src>
import jax
import jax.numpy as jnp
from jax.experimental import pallas as pl
from jax.experimental.pallas import tpu as pltpu


# ---------------------------------------------------------------------------
# Kernel
# ---------------------------------------------------------------------------
def _load_weight(ref):
    """Load a weight tile; widen int8 weight-only storage to bf16 on the VPU."""
    w = ref[...]
    if jnp.issubdtype(ref.dtype, jnp.integer):
        # int8 -> f32 -> bf16 (integers <= 127 are exact in bf16); per-channel
        # scales are applied to the f32 matmul result, not here.
        w = w.astype(jnp.float32).astype(jnp.bfloat16)
    return w


def _timestep_embedding_kernel(x_ref, w1_ref, b1_ref, s1_ref,
                               w2_ref, b2_ref, s2_ref, o_ref):
    # linear_1 + SiLU, recomputed per Hout tile.  This removes the step-0
    # scratch dependency so the grid axis can run "parallel" (megacore);
    # x/w1/b1/s1 have constant index_maps so there is no extra HBM traffic.
    w1 = _load_weight(w1_ref)
    h = jnp.dot(x_ref[...].astype(w1.dtype), w1,
                preferred_element_type=jnp.float32)
    h = h * s1_ref[...] + b1_ref[...]          # f32 scale + bias
    h = h * jax.nn.sigmoid(h)                  # SiLU in f32 (EUP sigmoid)

    # linear_2 on this Hout tile.
    w2 = _load_weight(w2_ref)
    o = jnp.dot(h.astype(w2.dtype), w2, preferred_element_type=jnp.float32)
    o_ref[...] = (o * s2_ref[...] + b2_ref[...]).astype(o_ref.dtype)


# ---------------------------------------------------------------------------
# Parameter preparation (call ONCE at module init, not per forward pass)
# ---------------------------------------------------------------------------
def _quantize_int8(w_t):
    """Per-output-channel symmetric int8 quantization of w_t [in, out]."""
    amax = jnp.max(jnp.abs(w_t), axis=0, keepdims=True)          # [1, out]
    scale = jnp.where(amax > 0, amax / 127.0, 1.0).astype(jnp.float32)
    w_i8 = jnp.round(w_t / scale).astype(jnp.int8)
    return w_i8, scale


def prepare_timestep_embedding_params(w1, b1, w2, b2,
                                      weight_dtype=jnp.bfloat16):
    """Convert PyTorch nn.Linear layout -> kernel layout, once.

    w1: [H, Cin], b1: [H], w2: [Hout, H], b2: [Hout]
    weight_dtype: jnp.bfloat16 (default), jnp.float32 (exact numerics), or
                  jnp.int8 (weight-only quant, per-output-channel scales).
    Returns (w1_t [Cin,H], b1 [1,H], s1 [1,H], w2_t [H,Hout], b2 [1,Hout], s2 [1,Hout]).
    """
    w1_t = jnp.asarray(w1, jnp.float32).T
    w2_t = jnp.asarray(w2, jnp.float32).T
    b1_r = jnp.asarray(b1, jnp.float32).reshape(1, -1)
    b2_r = jnp.asarray(b2, jnp.float32).reshape(1, -1)

    wd = jnp.dtype(weight_dtype)
    if jnp.issubdtype(wd, jnp.integer):
        w1_q, s1 = _quantize_int8(w1_t)
        w2_q, s2 = _quantize_int8(w2_t)
        return w1_q, b1_r, s1, w2_q, b2_r, s2

    s1 = jnp.ones((1, w1_t.shape[1]), jnp.float32)
    s2 = jnp.ones((1, w2_t.shape[1]), jnp.float32)
    return w1_t.astype(wd), b1_r, s1, w2_t.astype(wd), b2_r, s2


# ---------------------------------------------------------------------------
# Generation-aware sizing
# ---------------------------------------------------------------------------
def _vmem_capacity_bytes() -> int:
    try:
        return int(pltpu.get_tpu_info().vmem_capacity_bytes)
    except Exception:
        return 64 << 20     # conservative (v7x-sized) fallback


def _pick_hout_tile(h, hout, w_itemsize, budget_bytes):
    """Pick the Hout tile: whole Hout if it fits the (double-buffered) budget,
    else the largest 128-multiple divisor of Hout, else a 128-multiple tile
    with a cdiv grid (ragged, masked last tile)."""
    if 2 * h * hout * w_itemsize <= budget_bytes:
        return int(hout)
    best = None
    t = 128
    while t <= hout:
        if hout % t == 0 and 2 * h * t * w_itemsize <= budget_bytes:
            best = t
        t += 128
    if best is not None:
        return int(best)
    t = (budget_bytes // (2 * h * w_itemsize)) // 128 * 128
    return int(max(128, t))


def _vmem_limit_bytes(B, Cin, H, tn, x_itemsize, w_itemsize, out_itemsize,
                      capacity):
    const_bytes = B * Cin * x_itemsize + Cin * H * w_itemsize + 2 * H * 4
    tile_bytes = H * tn * w_itemsize + 2 * tn * 4 + B * tn * out_itemsize
    need = 2 * (const_bytes + tile_bytes)        # pipeline double-buffering
    limit = max(int(need * 1.5) + (2 << 20), 16 << 20)
    return int(min(limit, (capacity * 3) // 4))


# ---------------------------------------------------------------------------
# Forward
# ---------------------------------------------------------------------------
def tt_timestep_embedding(sample, params, hout_tile=None,
                          out_dtype=jnp.float32):
    """Fused linear_1 -> SiLU -> linear_2.

    sample : [B, Cin]
    params : output of prepare_timestep_embedding_params
    returns: [B, Hout] in out_dtype (f32 default, matching the module).
    """
    w1_t, b1, s1, w2_t, b2, s2 = params
    B, Cin = sample.shape
    cin_w, H = w1_t.shape
    h_w, Hout = w2_t.shape
    assert Cin == cin_w and H == h_w, (sample.shape, w1_t.shape, w2_t.shape)

    # Activations travel as bf16 whenever the weights are not f32 (half the x
    # DMA bytes, no per-step VPU cast inside the kernel).
    compute_dtype = (jnp.float32 if w1_t.dtype == jnp.float32
                     else jnp.bfloat16)
    x = jnp.asarray(sample).astype(compute_dtype)

    capacity = _vmem_capacity_bytes()
    w_itemsize = jnp.dtype(w2_t.dtype).itemsize
    if hout_tile is None:
        hout_tile = _pick_hout_tile(H, Hout, w_itemsize,
                                    budget_bytes=capacity // 5)
    tn = int(hout_tile)
    assert tn == Hout or tn % 128 == 0, (Hout, tn)
    num_tiles = int(pl.cdiv(Hout, tn))

    vmem_limit = _vmem_limit_bytes(
        B, Cin, H, tn,
        jnp.dtype(compute_dtype).itemsize, w_itemsize,
        jnp.dtype(out_dtype).itemsize, capacity)

    cost = pl.CostEstimate(
        flops=2 * B * (Cin * H * num_tiles + H * Hout),
        transcendentals=B * H * num_tiles,
        bytes_accessed=int(x.nbytes + w1_t.nbytes + b1.nbytes + s1.nbytes
                           + w2_t.nbytes + b2.nbytes + s2.nbytes
                           + B * Hout * jnp.dtype(out_dtype).itemsize),
    )

    return pl.pallas_call(
        _timestep_embedding_kernel,
        out_shape=jax.ShapeDtypeStruct((B, Hout), out_dtype),
        grid_spec=pltpu.PrefetchScalarGridSpec(
            num_scalar_prefetch=0,
            grid=(num_tiles,),
            in_specs=[
                pl.BlockSpec((B, Cin), lambda j: (0, 0)),   # x   (constant idx)
                pl.BlockSpec((Cin, H), lambda j: (0, 0)),   # w1  (constant idx)
                pl.BlockSpec((1, H), lambda j: (0, 0)),     # b1
                pl.BlockSpec((1, H), lambda j: (0, 0)),     # s1
                pl.BlockSpec((H, tn), lambda j: (0, j)),    # w2 column tile
                pl.BlockSpec((1, tn), lambda j: (0, j)),    # b2 tile
                pl.BlockSpec((1, tn), lambda j: (0, j)),    # s2 tile
            ],
            out_specs=pl.BlockSpec((B, tn), lambda j: (0, j)),
        ),
        compiler_params=pltpu.CompilerParams(
            # No cross-step dependency -> both v7x TensorCores can take tiles.
            dimension_semantics=("parallel",),
            vmem_limit_bytes=vmem_limit,
        ),
        cost_estimate=cost,
    )(x, w1_t, b1, s1, w2_t, b2, s2)


# ---------------------------------------------------------------------------
# References
# ---------------------------------------------------------------------------
def _reference_same_dtypes(sample, params):
    """Mirrors the kernel's dtype / quantization choices exactly."""
    w1_t, b1, s1, w2_t, b2, s2 = params

    def deq(w):
        if jnp.issubdtype(w.dtype, jnp.integer):
            return w.astype(jnp.float32).astype(jnp.bfloat16)
        return w

    w1 = deq(w1_t)
    w2 = deq(w2_t)
    cd = jnp.float32 if w1.dtype == jnp.float32 else jnp.bfloat16
    x = jnp.asarray(sample).astype(cd)
    h = jnp.dot(x.astype(w1.dtype), w1,
                preferred_element_type=jnp.float32) * s1 + b1
    h = h * jax.nn.sigmoid(h)
    return jnp.dot(h.astype(w2.dtype), w2,
                   preferred_element_type=jnp.float32) * s2 + b2


def _reference_f32(sample, w1, b1, w2, b2):
    """Exact PyTorch-module semantics in f32 (sanity check)."""
    x = jnp.asarray(sample, jnp.float32)
    h = x @ w1.T + b1
    h = h * jax.nn.sigmoid(h)
    return h @ w2.T + b2


if __name__ == "__main__":
    # Small shapes consistent with the module:
    #   in_channels=32, time_embed_dim=128, out_dim=None, batch=2
    B, Cin, H = 2, 32, 128
    key = jax.random.PRNGKey(0)
    k_x, k_w1, k_b1, k_w2, k_b2 = jax.random.split(key, 5)

    sample = jax.random.normal(k_x, (B, Cin), dtype=jnp.float32)
    # PyTorch nn.Linear weight layout: [out_features, in_features].
    w1 = jax.random.normal(k_w1, (H, Cin), dtype=jnp.float32) * 0.05
    b1 = jax.random.normal(k_b1, (H,), dtype=jnp.float32) * 0.05
    w2 = jax.random.normal(k_w2, (H, H), dtype=jnp.float32) * 0.05
    b2 = jax.random.normal(k_b2, (H,), dtype=jnp.float32) * 0.05

    # --- default bf16-weight path, single Hout block ---
    params = prepare_timestep_embedding_params(w1, b1, w2, b2)
    out = jax.block_until_ready(tt_timestep_embedding(sample, params))
    assert out.shape == (B, H), out.shape
    ref_same = _reference_same_dtypes(sample, params)
    assert jnp.allclose(out, ref_same, atol=2e-3, rtol=2e-3), \
        "bf16 path: mismatch vs same-dtype reference"
    ref_f32 = _reference_f32(sample, w1, b1, w2, b2)
    assert jnp.allclose(out, ref_f32, atol=2e-2, rtol=2e-2), \
        "bf16 path: mismatch vs f32 reference"

    # --- multi-tile Hout path (parallel grid axis), forced tn=128 ---
    Hout2 = 256
    w2b = jax.random.normal(k_w2, (Hout2, H), dtype=jnp.float32) * 0.05
    b2b = jax.random.normal(k_b2, (Hout2,), dtype=jnp.float32) * 0.05
    params2 = prepare_timestep_embedding_params(w1, b1, w2b, b2b)
    out2 = jax.block_until_ready(
        tt_timestep_embedding(sample, params2, hout_tile=128))
    assert out2.shape == (B, Hout2), out2.shape
    ref2 = _reference_same_dtypes(sample, params2)
    assert jnp.allclose(out2, ref2, atol=2e-3, rtol=2e-3), \
        "tiled path: mismatch vs same-dtype reference"

    # --- int8 weight-only quantization path (v5e/v6e HBM saver) ---
    params_q = prepare_timestep_embedding_params(w1, b1, w2b, b2b,
                                                 weight_dtype=jnp.int8)
    out_q = jax.block_until_ready(
        tt_timestep_embedding(sample, params_q, hout_tile=128))
    ref_q = _reference_same_dtypes(sample, params_q)
    assert jnp.allclose(out_q, ref_q, atol=2e-3, rtol=2e-3), \
        "int8 path: mismatch vs same-quantization reference"
    ref_q_f32 = _reference_f32(sample, w1, b1, w2b, b2b)
    assert jnp.allclose(out_q, ref_q_f32, atol=5e-2, rtol=5e-2), \
        "int8 path: drifted too far from f32 reference"

    # --- f32-weight option (closest to exact PyTorch numerics) ---
    params_f = prepare_timestep_embedding_params(w1, b1, w2, b2,
                                                 weight_dtype=jnp.float32)
    out_f = jax.block_until_ready(tt_timestep_embedding(sample, params_f))
    assert jnp.allclose(out_f, ref_f32, atol=1e-2, rtol=1e-2), \
        "f32 path: mismatch vs f32 reference"

    print("KERNEL_OK")
</pallas_src>

<mosaic_0001>
module attributes {stable_mosaic.version = 11 : i64} {
  func.func @_timestep_embedding_kernel(%arg0: i32, %arg1: memref<2x32xbf16, #tpu.memory_space<vmem>>, %arg2: memref<32x128xbf16, #tpu.memory_space<vmem>>, %arg3: memref<1x128xf32, #tpu.memory_space<vmem>>, %arg4: memref<1x128xf32, #tpu.memory_space<vmem>>, %arg5: memref<128x128xbf16, #tpu.memory_space<vmem>>, %arg6: memref<1x128xf32, #tpu.memory_space<vmem>>, %arg7: memref<1x128xf32, #tpu.memory_space<vmem>>, %arg8: memref<2x128xf32, #tpu.memory_space<vmem>>) attributes {dimension_semantics = [#tpu.dimension_semantics<parallel>], iteration_bounds = array<i64: 1>, scalar_prefetch = 0 : i64, scratch_operands = 0 : i64, tpu.core_type = #tpu.core_type<tc>, window_params = [{pipeline_mode = #tpu.pipeline_mode<synchronous>, transform_indices = @transform_0, window_bounds = array<i64: 2, 32>}, {pipeline_mode = #tpu.pipeline_mode<synchronous>, transform_indices = @transform_1, window_bounds = array<i64: 32, 128>}, {pipeline_mode = #tpu.pipeline_mode<synchronous>, transform_indices = @transform_2, window_bounds = array<i64: 1, 128>}, {pipeline_mode = #tpu.pipeline_mode<synchronous>, transform_indices = @transform_3, window_bounds = array<i64: 1, 128>}, {transform_indices = @transform_4, window_bounds = array<i64: 128, 128>}, {transform_indices = @transform_5, window_bounds = array<i64: 1, 128>}, {transform_indices = @transform_6, window_bounds = array<i64: 1, 128>}, {transform_indices = @transform_7, window_bounds = array<i64: 2, 128>}]} {
    %c0 = arith.constant 0 : index
    %c0_0 = arith.constant 0 : index
    %0 = vector.load %arg2[%c0, %c0_0] : memref<32x128xbf16, #tpu.memory_space<vmem>>, vector<32x128xbf16>
    %c0_1 = arith.constant 0 : index
    %c0_2 = arith.constant 0 : index
    %1 = vector.load %arg1[%c0_1, %c0_2] : memref<2x32xbf16, #tpu.memory_space<vmem>>, vector<2x32xbf16>
    %cst = arith.constant dense<0.000000e+00> : vector<2x128xf32>
    %2 = tpu.matmul %1, %0, %cst {dimension_numbers = #tpu.dot_dimension_numbers<[1], [0], [0], [1], [0, 0, 1, 1], [], []>} : vector<2x32xbf16>, vector<32x128xbf16>, vector<2x128xf32> -> vector<2x128xf32>
    %c0_3 = arith.constant 0 : index
    %c0_4 = arith.constant 0 : index
    %3 = vector.load %arg4[%c0_3, %c0_4] : memref<1x128xf32, #tpu.memory_space<vmem>>, vector<1x128xf32>
    %4 = vector.broadcast %3 : vector<1x128xf32> to vector<2x128xf32>
    %5 = arith.mulf %2, %4 : vector<2x128xf32>
    %c0_5 = arith.constant 0 : index
    %c0_6 = arith.constant 0 : index
    %6 = vector.load %arg3[%c0_5, %c0_6] : memref<1x128xf32, #tpu.memory_space<vmem>>, vector<1x128xf32>
    %7 = vector.broadcast %6 : vector<1x128xf32> to vector<2x128xf32>
    %8 = arith.addf %5, %7 : vector<2x128xf32>
    %9 = arith.negf %8 : vector<2x128xf32>
    %10 = math.exp %9 : vector<2x128xf32>
    %cst_7 = arith.constant 1.000000e+00 : f32
    %11 = vector.broadcast %cst_7 : f32 to vector<2x128xf32>
    %12 = arith.addf %11, %10 : vector<2x128xf32>
    %13 = arith.divf %11, %12 : vector<2x128xf32>
    %14 = arith.mulf %8, %13 : vector<2x128xf32>
    %c0_8 = arith.constant 0 : index
    %c0_9 = arith.constant 0 : index
    %15 = vector.load %arg5[%c0_8, %c0_9] : memref<128x128xbf16, #tpu.memory_space<vmem>>, vector<128x128xbf16>
    %16 = arith.truncf %14 : vector<2x128xf32> to vector<2x128xbf16>
    %cst_10 = arith.constant dense<0.000000e+00> : vector<2x128xf32>
    %17 = tpu.matmul %16, %15, %cst_10 {dimension_numbers = #tpu.dot_dimension_numbers<[1], [0], [0], [1], [0, 0, 1, 1], [], []>} : vector<2x128xbf16>, vector<128x128xbf16>, vector<2x128xf32> -> vector<2x128xf32>
    %c0_11 = arith.constant 0 : index
    %c0_12 = arith.constant 0 : index
    %18 = vector.load %arg7[%c0_11, %c0_12] : memref<1x128xf32, #tpu.memory_space<vmem>>, vector<1x128xf32>
    %19 = vector.broadcast %18 : vector<1x128xf32> to vector<2x128xf32>
    %20 = arith.mulf %17, %19 : vector<2x128xf32>
    %c0_13 = arith.constant 0 : index
    %c0_14 = arith.constant 0 : index
    %21 = vector.load %arg6[%c0_13, %c0_14] : memref<1x128xf32, #tpu.memory_space<vmem>>, vector<1x128xf32>
    %22 = vector.broadcast %21 : vector<1x128xf32> to vector<2x128xf32>
    %23 = arith.addf %20, %22 : vector<2x128xf32>
    %c0_15 = arith.constant 0 : index
    %c0_16 = arith.constant 0 : index
    %24 = vector.load %arg8[%c0_15, %c0_16] : memref<2x128xf32, #tpu.memory_space<vmem>>, vector<2x128xf32>
    tpu.vector_store %arg8[%c0_15, %c0_16], %23 {strides = array<i32>} : memref<2x128xf32, #tpu.memory_space<vmem>>, vector<2x128xf32>,
    return
  }
  func.func @transform_0(%arg0: i32) -> (i32, i32) {
    %c0_i32 = arith.constant 0 : i32
    %c0_i32_0 = arith.constant 0 : i32
    %c0_i32_1 = arith.constant 0 : i32
    return %c0_i32, %c0_i32_0 : i32, i32
  }
  func.func @transform_1(%arg0: i32) -> (i32, i32) {
    %c0_i32 = arith.constant 0 : i32
    %c0_i32_0 = arith.constant 0 : i32
    %c0_i32_1 = arith.constant 0 : i32
    return %c0_i32, %c0_i32_0 : i32, i32
  }
  func.func @transform_2(%arg0: i32) -> (i32, i32) {
    %c0_i32 = arith.constant 0 : i32
    %c0_i32_0 = arith.constant 0 : i32
    %c0_i32_1 = arith.constant 0 : i32
    return %c0_i32, %c0_i32_0 : i32, i32
  }
  func.func @transform_3(%arg0: i32) -> (i32, i32) {
    %c0_i32 = arith.constant 0 : i32
    %c0_i32_0 = arith.constant 0 : i32
    %c0_i32_1 = arith.constant 0 : i32
    return %c0_i32, %c0_i32_0 : i32, i32
  }
  func.func @transform_4(%arg0: i32) -> (i32, i32) {
    %c0_i32 = arith.constant 0 : i32
    %c0_i32_0 = arith.constant 0 : i32
    return %c0_i32, %arg0 : i32, i32
  }
  func.func @transform_5(%arg0: i32) -> (i32, i32) {
    %c0_i32 = arith.constant 0 : i32
    %c0_i32_0 = arith.constant 0 : i32
    return %c0_i32, %arg0 : i32, i32
  }
  func.func @transform_6(%arg0: i32) -> (i32, i32) {
    %c0_i32 = arith.constant 0 : i32
    %c0_i32_0 = arith.constant 0 : i32
    return %c0_i32, %arg0 : i32, i32
  }
  func.func @transform_7(%arg0: i32) -> (i32, i32) {
    %c0_i32 = arith.constant 0 : i32
    %c0_i32_0 = arith.constant 0 : i32
    return %c0_i32, %arg0 : i32, i32
  }
}

</mosaic_0001>

<llo_original>
// kernel: tpu_custom_call.1
$region0: #{tpu_custom_call.1}
  #allocation0 [shape = 'u32[]', space=smem, size = 0x4, offset = 0x4, fixed_abs, tag = 'smem constant byte address 0x4 - core index']
  #allocation1 [shape = 'u32[144,128]{1,0:T(1,128)}', space=vmem, size = 0x12000, scoped, tag = 'internal scratch']
  %s0 = inlined_call_operand.hbm [shape: bf16[2,32], index: 0, kind: input, shape index: {}]
  %s1 = inlined_call_operand.hbm [shape: bf16[32,128], index: 1, kind: input, shape index: {}]
  %s2 = inlined_call_operand.vmem [shape: f32[1,128], index: 2, kind: input, shape index: {}]
  %s3 = inlined_call_operand.vmem [shape: f32[1,128], index: 3, kind: input, shape index: {}]
  %s4 = inlined_call_operand.hbm [shape: bf16[128,128], index: 4, kind: input, shape index: {}]
  %s5 = inlined_call_operand.vmem [shape: f32[1,128], index: 5, kind: input, shape index: {}]
  %s6 = inlined_call_operand.vmem [shape: f32[1,128], index: 6, kind: input, shape index: {}]
  %s7 = inlined_call_operand.hbm [shape: f32[2,128], index: 7, kind: output, shape index: {}]
  %s8 = sld [smem:[#allocation0]]
  $region50: #{tpu_custom_call.1} parent=0
    _
  %s10 = ssub.s32 1, %s8
  %s11 = scalar_select 0, %s10, %s8
  $region1: #{tpu_custom_call.1} parent=0
    #allocation2 [shape = 'u8[512]{0}', space=vmem, size = 0x400, scoped, tag = 'input window, operand 0, single buffered']
    #allocation3 [shape = 's32[1]{0}', space=sflag, size = 0x4, scoped, tag = 'scoped memory for tpu_custom_call.1']
    #allocation4 [shape = 's32[1]{0}', space=sflag, size = 0x4, scoped, tag = 'scoped memory for tpu_custom_call.1']
    #allocation5 [shape = 'u8[8192]{0}', space=vmem, size = 0x2000, scoped, tag = 'input window, operand 1, single buffered']
    #allocation6 [shape = 's32[1]{0}', space=sflag, size = 0x4, scoped, tag = 'scoped memory for tpu_custom_call.1']
    #allocation7 [shape = 'u8[32768]{0}', space=vmem, size = 0x8000, scoped, tag = 'input window, operand 4, single buffered']
    #allocation8 [shape = 'u8[1024]{0}', space=vmem, size = 0x400, scoped, tag = 'output window, operand 0, single buffered']
    %12 = vsyncpa [#allocation3], 0
    %13 = vsyncpa [#allocation6], 0
    %14 = vsyncpa [#allocation4], 0
    // Predicated region
    $region2: #{tpu_custom_call.1} parent=1 // pred_check
      _
    $region3: #{tpu_custom_call.1} parent=1 // pred_check_branch
      %16 = sbr.rel (0) target = $region5
    $region4: #{tpu_custom_call.1} parent=1 // pred_region
      %s18 = ssub.s32 16, 16
      %19 = vsyncadd [#allocation3], %s18
      %s21 = sshll.u32 [#allocation2], 4
      %s22 = int_to_ptr.vmem [resolvable:$true] %s21
      %24 = dma.hbm_to_vmem [thread:$0]  %s0, 16, %s22, [#allocation3]
    $region5: #{tpu_custom_call.1} parent=1 // pred_fallthru
      _
    // Predicated region
    $region6: #{tpu_custom_call.1} parent=1 // pred_check
      _
    $region7: #{tpu_custom_call.1} parent=1 // pred_check_branch
      %26 = sbr.rel (0) target = $region9
    $region8: #{tpu_custom_call.1} parent=1 // pred_region
      %s28 = ssub.s32 256, 256
      %29 = vsyncadd [#allocation6], %s28
      %s30 = sshll.u32 [#allocation5], 4
      %s31 = int_to_ptr.vmem [resolvable:$true] %s30
      %36 = dma.hbm_to_vmem [thread:$0]  %s1, 256, %s31, [#allocation6], 64, 64, 4
    $region9: #{tpu_custom_call.1} parent=1 // pred_fallthru
      _
    // Predicated region
    $region10: #{tpu_custom_call.1} parent=1 // pred_check
      _
    $region11: #{tpu_custom_call.1} parent=1 // pred_check_branch
      %38 = sbr.rel (0) target = $region13
    $region12: #{tpu_custom_call.1} parent=1 // pred_region
      _
    $region13: #{tpu_custom_call.1} parent=1 // pred_fallthru
      _
    // Predicated region
    $region14: #{tpu_custom_call.1} parent=1 // pred_check
      _
    $region15: #{tpu_custom_call.1} parent=1 // pred_check_branch
      %40 = sbr.rel (0) target = $region17
    $region16: #{tpu_custom_call.1} parent=1 // pred_region
      _
    $region17: #{tpu_custom_call.1} parent=1 // pred_fallthru
      _
    // Predicated region
    $region18: #{tpu_custom_call.1} parent=1 // pred_check
      _
    $region19: #{tpu_custom_call.1} parent=1 // pred_check_branch
      %42 = sbr.rel (0) target = $region21
    $region20: #{tpu_custom_call.1} parent=1 // pred_region
      %s44 = ssub.s32 1024, 1024
      %45 = vsyncadd [#allocation6], %s44
      %s46 = sshll.u32 [#allocation7], 4
      %s47 = int_to_ptr.vmem [resolvable:$true] %s46
      %52 = dma.hbm_to_vmem [thread:$0]  %s4, 1024, %s47, [#allocation6], 64, 64, 4
    $region21: #{tpu_custom_call.1} parent=1 // pred_fallthru
      _
    // Predicated region
    $region22: #{tpu_custom_call.1} parent=1 // pred_check
      _
    $region23: #{tpu_custom_call.1} parent=1 // pred_check_branch
      %54 = sbr.rel (0) target = $region25
    $region24: #{tpu_custom_call.1} parent=1 // pred_region
      _
    $region25: #{tpu_custom_call.1} parent=1 // pred_fallthru
      _
    // Predicated region
    $region26: #{tpu_custom_call.1} parent=1 // pred_check
      _
    $region27: #{tpu_custom_call.1} parent=1 // pred_check_branch
      %56 = sbr.rel (0) target = $region29
    $region28: #{tpu_custom_call.1} parent=1 // pred_region
      _
    $region29: #{tpu_custom_call.1} parent=1 // pred_fallthru
      _
    // Predicated region
    $region30: #{tpu_custom_call.1} parent=1 // pred_check
      _
    $region31: #{tpu_custom_call.1} parent=1 // pred_check_branch
      %58 = sbr.rel (0) target = $region33
    $region32: #{tpu_custom_call.1} parent=1 // pred_region
      %59 = dma.done [#allocation3], 16
    $region33: #{tpu_custom_call.1} parent=1 // pred_fallthru
      _
    // Predicated region
    $region34: #{tpu_custom_call.1} parent=1 // pred_check
      _
    $region35: #{tpu_custom_call.1} parent=1 // pred_check_branch
      %61 = sbr.rel (0) target = $region37
    $region36: #{tpu_custom_call.1} parent=1 // pred_region
      %62 = dma.done [#allocation6], 256
    $region37: #{tpu_custom_call.1} parent=1 // pred_fallthru
      _
    // Predicated region
    $region38: #{tpu_custom_call.1} parent=1 // pred_check
      _
    $region39: #{tpu_custom_call.1} parent=1 // pred_check_branch
      %64 = sbr.rel (0) target = $region41
    $region40: #{tpu_custom_call.1} parent=1 // pred_region
      %65 = dma.done [#allocation6], 1024
    $region41: #{tpu_custom_call.1} parent=1 // pred_fallthru
      _
    %v67 = vld [vmem:[#allocation5] sm:$0xf]
    %v68 = vld [vmem:[#allocation5 + $0x4] sm:$0xf]
    %v69 = vld [vmem:[#allocation5 + $0x8] sm:$0xf]
    %v70 = vld [vmem:[#allocation5 + $0xc] sm:$0xf]
    %v71 = vld [vmem:[#allocation2] sm:$0x1]
    %v76 = vunpack.c.l.b16 %v67
    %v77 = vunpack.c.l.b16 %v68
    %v78 = vunpack.c.l.b16 %v69
    %v79 = vunpack.c.l.b16 %v70
    %v80 = vpack.c.b16 %v77, %v76
    %v81 = vpack.c.b16 %v79, %v78
    %vm84 = vcmask 261120
    %v86 = vsel %vm84, %v71, 0
    %88 = vmatprep.subr.bf16.mxu0 0
    %89 = vmatpush1.bf16.msra.mxu0 %v80
    %90 = vmatprep.subr.bf16.mxu0 0
    %91 = vmatpush1.bf16.msra.mxu0 %v81
    %92 = vmatprep.subr.bf16.mxu0 0
    %93 = vmatpush1.bf16.msra.mxu0 0
    %94 = vmatprep.subr.bf16.mxu0 0
    %95 = vmatpush1.bf16.msra.mxu0 0
    %96 = vmatprep.subr.bf16.mxu0 0
    %97 = vmatpush1.bf16.msra.mxu0 0
    %98 = vmatprep.subr.bf16.mxu0 0
    %99 = vmatpush1.bf16.msra.mxu0 0
    %100 = vmatprep.subr.bf16.mxu0 0
    %101 = vmatpush1.bf16.msra.mxu0 0
    %102 = vmatprep.subr.bf16.mxu0 0
    %103 = vmatpush1.bf16.msra.mxu0 0
    %104 = vmatprep.subr.bf16.mxu0 0
    %105 = vmatpush1.bf16.msra.mxu0 0
    %106 = vmatprep.subr.bf16.mxu0 0
    %107 = vmatpush1.bf16.msra.mxu0 0
    %108 = vmatprep.subr.bf16.mxu0 0
    %109 = vmatpush1.bf16.msra.mxu0 0
    %110 = vmatprep.subr.bf16.mxu0 0
    %111 = vmatpush1.bf16.msra.mxu0 0
    %112 = vmatprep.subr.bf16.mxu0 0
    %113 = vmatpush1.bf16.msra.mxu0 0
    %114 = vmatprep.subr.bf16.mxu0 0
    %115 = vmatpush1.bf16.msra.mxu0 0
    %116 = vmatprep.subr.bf16.mxu0 0
    %117 = vmatpush1.bf16.msra.mxu0 0
    %118 = vmatprep.subr.bf16.mxu0 0
    %119 = vmatpush1.bf16.msra.mxu0 0
    %120 = vmatprep.mubr.bf16.mxu0 0
    %121 = vmatmul.mubr.bf16.gmra.mrb[0].mxu0 %v86
    %v122 = vpop.f32.mrb[0].mxu0
    %v123 = vadd.f32 0.0, %v122
    %v124 = vpop.f32.mrb[0].mxu0
    %v125 = vpop.f32.mrb[0].mxu0
    %v126 = vpop.f32.mrb[0].mxu0
    %127 = vdwg.mxu0
    %v128 = vld [vmem:[%s3] sm:$0x1]
    %v130 = vlaneseq
    %v131 = vshrl.u32 %v130, 7
    %v132 = vsub.s32 0, %v131
    %v133 = vrot.slane %v128, %v132
    %v135 = vmul.f32 %v123, %v133
    %v136 = vld [vmem:[%s2] sm:$0x1]
    %v138 = vlaneseq
    %v139 = vshrl.u32 %v138, 7
    %v140 = vsub.s32 0, %v139
    %v141 = vrot.slane %v136, %v140
    %v143 = vadd.f32 %v135, %v141
    %v144 = vxor.u32 %v143, 2147483648
    %v145 = vmul.f32 %v144, 1.442695
    %v146 = vpow.pop %v145
    %v147 = vadd.f32 %v146, 1.0
    %v148 = vrcp.pop %v147
    %v149 = vmul.f32 1.0, %v148
    %v150 = vmul.f32 %v143, %v149
    %v151 = vld [vmem:[#allocation7] sm:$0xf]
    %v152 = vld [vmem:[#allocation7 + $0x4] sm:$0xf]
    %v153 = vld [vmem:[#allocation7 + $0x8] sm:$0xf]
    %v154 = vld [vmem:[#allocation7 + $0xc] sm:$0xf]
    %v155 = vld [vmem:[#allocation7 + $0x10] sm:$0xf]
    %v156 = vld [vmem:[#allocation7 + $0x14] sm:$0xf]
    %v157 = vld [vmem:[#allocation7 + $0x18] sm:$0xf]
    %v158 = vld [vmem:[#allocation7 + $0x1c] sm:$0xf]
    %v159 = vld [vmem:[#allocation7 + $0x20] sm:$0xf]
    %v160 = vld [vmem:[#allocation7 + $0x24] sm:$0xf]
    %v161 = vld [vmem:[#allocation7 + $0x28] sm:$0xf]
    %v162 = vld [vmem:[#allocation7 + $0x2c] sm:$0xf]
    %v163 = vld [vmem:[#allocation7 + $0x30] sm:$0xf]
    %v164 = vld [vmem:[#allocation7 + $0x34] sm:$0xf]
    %v165 = vld [vmem:[#allocation7 + $0x38] sm:$0xf]
    %v166 = vld [vmem:[#allocation7 + $0x3c] sm:$0xf]
    %v167 = vpack.c.bf16 %v150, %v150
    %v184 = vunpack.c.l.b16 %v151
    %v185 = vunpack.c.l.b16 %v152
    %v186 = vunpack.c.l.b16 %v153
    %v187 = vunpack.c.l.b16 %v154
    %v188 = vunpack.c.l.b16 %v155
    %v189 = vunpack.c.l.b16 %v156
    %v190 = vunpack.c.l.b16 %v157
    %v191 = vunpack.c.l.b16 %v158
    %v192 = vunpack.c.l.b16 %v159
    %v193 = vunpack.c.l.b16 %v160
    %v194 = vunpack.c.l.b16 %v161
    %v195 = vunpack.c.l.b16 %v162
    %v196 = vunpack.c.l.b16 %v163
    %v197 = vunpack.c.l.b16 %v164
    %v198 = vunpack.c.l.b16 %v165
    %v199 = vunpack.c.l.b16 %v166
    %v200 = vpack.c.b16 %v185, %v184
    %v201 = vpack.c.b16 %v187, %v186
    %v202 = vpack.c.b16 %v189, %v188
    %v203 = vpack.c.b16 %v191, %v190
    %v204 = vpack.c.b16 %v193, %v192
    %v205 = vpack.c.b16 %v195, %v194
    %v206 = vpack.c.b16 %v197, %v196
    %v207 = vpack.c.b16 %v199, %v198
    %216 = vmatprep.subr.bf16.mxu0 0
    %217 = vmatpush1.bf16.msra.mxu0 %v200
    %218 = vmatprep.subr.bf16.mxu0 0
    %219 = vmatpush1.bf16.msra.mxu0 %v201
    %220 = vmatprep.subr.bf16.mxu0 0
    %221 = vmatpush1.bf16.msra.mxu0 %v202
    %222 = vmatprep.subr.bf16.mxu0 0
    %223 = vmatpush1.bf16.msra.mxu0 %v203
    %224 = vmatprep.subr.bf16.mxu0 0
    %225 = vmatpush1.bf16.msra.mxu0 %v204
    %226 = vmatprep.subr.bf16.mxu0 0
    %227 = vmatpush1.bf16.msra.mxu0 %v205
    %228 = vmatprep.subr.bf16.mxu0 0
    %229 = vmatpush1.bf16.msra.mxu0 %v206
    %230 = vmatprep.subr.bf16.mxu0 0
    %231 = vmatpush1.bf16.msra.mxu0 %v207
    %232 = vmatprep.subr.bf16.mxu0 0
    %233 = vmatpush1.bf16.msra.mxu0 0
    %234 = vmatprep.subr.bf16.mxu0 0
    %235 = vmatpush1.bf16.msra.mxu0 0
    %236 = vmatprep.subr.bf16.mxu0 0
    %237 = vmatpush1.bf16.msra.mxu0 0
    %238 = vmatprep.subr.bf16.mxu0 0
    %239 = vmatpush1.bf16.msra.mxu0 0
    %240 = vmatprep.subr.bf16.mxu0 0
    %241 = vmatpush1.bf16.msra.mxu0 0
    %242 = vmatprep.subr.bf16.mxu0 0
    %243 = vmatpush1.bf16.msra.mxu0 0
    %244 = vmatprep.subr.bf16.mxu0 0
    %245 = vmatpush1.bf16.msra.mxu0 0
    %246 = vmatprep.subr.bf16.mxu0 0
    %247 = vmatpush1.bf16.msra.mxu0 0
    %248 = vmatprep.mubr.bf16.mxu0 0
    %249 = vmatmul.mubr.bf16.gmra.mrb[0].mxu0 %v167
    %v250 = vpop.f32.mrb[0].mxu0
    %v251 = vadd.f32 0.0, %v250
    %v252 = vpop.f32.mrb[0].mxu0
    %v253 = vpop.f32.mrb[0].mxu0
    %v254 = vpop.f32.mrb[0].mxu0
    %255 = vdwg.mxu0
    %v256 = vld [vmem:[%s6] sm:$0x1]
    %v258 = vlaneseq
    %v259 = vshrl.u32 %v258, 7
    %v260 = vsub.s32 0, %v259
    %v261 = vrot.slane %v256, %v260
    %v263 = vmul.f32 %v251, %v261
    %v264 = vld [vmem:[%s5] sm:$0x1]
    %v266 = vlaneseq
    %v267 = vshrl.u32 %v266, 7
    %v268 = vsub.s32 0, %v267
    %v269 = vrot.slane %v264, %v268
    %v271 = vadd.f32 %v263, %v269
    %272 = vst [vmem:[#allocation8] sm:$0x3] %v271
    // Predicated region
    $region42: #{tpu_custom_call.1} parent=1 // pred_check
      _
    $region43: #{tpu_custom_call.1} parent=1 // pred_check_branch
      %274 = sbr.rel (0) target = $region45
    $region44: #{tpu_custom_call.1} parent=1 // pred_region
      %s276 = ssub.s32 32, 32
      %277 = vsyncadd [#allocation4], %s276
      %s279 = sshll.u32 [#allocation8], 4
      %s280 = int_to_ptr.vmem [resolvable:$true] %s279
      %282 = dma.vmem_to_hbm [thread:$0]  %s280, 32, %s7, [#allocation4]
    $region45: #{tpu_custom_call.1} parent=1 // pred_fallthru
      _
    // Predicated region
    $region46: #{tpu_custom_call.1} parent=1 // pred_check
      _
    $region47: #{tpu_custom_call.1} parent=1 // pred_check_branch
      %284 = sbr.rel (0) target = $region49
    $region48: #{tpu_custom_call.1} parent=1 // pred_region
      %285 = dma.done [#allocation4], 32
    $region49: #{tpu_custom_call.1} parent=1 // pred_fallthru
      _
    %286 = vsyncpa [#allocation3], 1
    %287 = vsyncpa [#allocation6], 1
    %288 = vsyncpa [#allocation4], 1

</llo_original>
